<compile_context>
chip_gen: v7x
topology: tpu7x:2x2x1
jax: 0.10.0
libtpu: 0.0.40
codegen_flags: <defaults>
</compile_context>

<pallas_src>
import jax
import jax.numpy as jnp
import numpy as np
from jax.experimental import pallas as pl
from jax.experimental.pallas import tpu as pltpu


# ----------------------------------------------------------------------------
# Fused Pallas kernel: conv1+BN+LReLU -> conv2+BN+LReLU -> fc1+LReLU -> fc2
# ----------------------------------------------------------------------------
def fused_forward_kernel(x_ref, w1_ref, g1_ref, b1_ref, w2_ref, g2_ref, b2_ref,
                         w3_ref, b3_ref, w4_ref, b4_ref, o_ref):
    eps = 1e-5

    # --- conv block 1: Conv2d(Cin->C1, 4, 2, 1) as a single matmul -----------
    # x: (B, Cin*4*4);  w1: (Cin*16, 4*C1) with zero-padding folded in.
    # y1 lane layout: [b, p*C1 + c], p = oh*2+ow in {0..3}.
    y1 = jnp.dot(x_ref[...], w1_ref[...], preferred_element_type=jnp.float32)
    B = y1.shape[0]
    C1 = y1.shape[1] // 4
    n1 = 4 * B                      # BN samples per channel = B * OH * OW

    # BatchNorm2d(C1), batch stats, one pass.  Channel c lives in lanes
    # {c, C1+c, 2C1+c, 3C1+c}; fold those groups with a constant matrix on MXU.
    s = jnp.sum(y1, axis=0, keepdims=True)          # (1, 4*C1)
    sq = jnp.sum(y1 * y1, axis=0, keepdims=True)    # (1, 4*C1)
    ii = jax.lax.broadcasted_iota(jnp.int32, (4 * C1, 4 * C1), 0)
    jj = jax.lax.broadcasted_iota(jnp.int32, (4 * C1, 4 * C1), 1)
    fold = ((ii % C1) == (jj % C1)).astype(jnp.float32) * jnp.float32(1.0 / n1)
    mean1 = jnp.dot(s, fold, preferred_element_type=jnp.float32)    # (1, 4*C1)
    msq1 = jnp.dot(sq, fold, preferred_element_type=jnp.float32)
    var1 = msq1 - mean1 * mean1
    scale1 = jax.lax.rsqrt(var1 + eps) * g1_ref[...]   # gamma pre-tiled to 4*C1
    shift1 = b1_ref[...] - mean1 * scale1
    h1 = y1 * scale1 + shift1
    h1 = jnp.where(h1 >= 0.0, h1, 0.2 * h1)            # LeakyReLU(0.2)

    # --- conv block 2: Conv2d(C1->C2, 4, 2, 1), 1x1 output, as a matmul ------
    y2 = jnp.dot(h1, w2_ref[...], preferred_element_type=jnp.float32)  # (B, C2)
    mean2 = jnp.sum(y2, axis=0, keepdims=True) * jnp.float32(1.0 / B)
    msq2 = jnp.sum(y2 * y2, axis=0, keepdims=True) * jnp.float32(1.0 / B)
    var2 = msq2 - mean2 * mean2
    scale2 = jax.lax.rsqrt(var2 + eps) * g2_ref[...]
    shift2 = b2_ref[...] - mean2 * scale2
    h2 = y2 * scale2 + shift2
    h2 = jnp.where(h2 >= 0.0, h2, 0.2 * h2)

    # --- proj layers: Linear + LeakyReLU(0.2), then Linear (no activation) ---
    h3 = jnp.dot(h2, w3_ref[...], preferred_element_type=jnp.float32) + b3_ref[...]
    h3 = jnp.where(h3 >= 0.0, h3, 0.2 * h3)
    o_ref[...] = jnp.dot(h3, w4_ref[...], preferred_element_type=jnp.float32) + b4_ref[...]


# ----------------------------------------------------------------------------
# One-time parameter preparation (outside the jitted forward)
# ----------------------------------------------------------------------------
def prepare_params(params, conv_in_sz=4):
    """Pre-lower conv weights to matmul form, pre-transpose fc weights,
    drop conv biases (cancelled exactly by batch-statistics BatchNorm)."""
    assert conv_in_sz == 4, "prep specialised to the 4x4 -> 2x2 -> 1x1 config"

    w1 = np.asarray(params["conv1_w"], np.float32)      # (C1, Cin, 4, 4)
    C1, Cin, K, _ = w1.shape
    # W1eff[cin*16 + h*4 + w, (oh*2+ow)*C1 + cout] = w1[cout, cin, ky, kx]
    # with ky = h - 2*oh + 1, kx = w - 2*ow + 1 (zero where out of the kernel).
    w1_eff = np.zeros((Cin, 4, 4, 2, 2, C1), np.float32)
    for oh in range(2):
        for ow in range(2):
            for h in range(4):
                for w in range(4):
                    ky, kx = h - 2 * oh + 1, w - 2 * ow + 1
                    if 0 <= ky < K and 0 <= kx < K:
                        w1_eff[:, h, w, oh, ow, :] = w1[:, :, ky, kx].T
    w1_eff = w1_eff.reshape(Cin * 16, 4 * C1)

    w2 = np.asarray(params["conv2_w"], np.float32)      # (C2, C1, 4, 4)
    C2 = w2.shape[0]
    # 1x1 output: only kernel taps (1..2, 1..2) touch data.
    # W2eff[(oh*2+ow)*C1 + cin, cout] = w2[cout, cin, oh+1, ow+1]
    w2_eff = np.transpose(w2[:, :, 1:3, 1:3], (2, 3, 1, 0)).reshape(4 * C1, C2)

    tile4 = lambda v: np.tile(np.asarray(v, np.float32), 4)[None, :]
    row = lambda v: np.asarray(v, np.float32)[None, :]

    return {
        "w1": jnp.asarray(w1_eff),
        "g1": jnp.asarray(tile4(params["bn1_g"])),      # gamma in [p*C1+c] layout
        "b1": jnp.asarray(tile4(params["bn1_b"])),
        "w2": jnp.asarray(w2_eff),
        "g2": jnp.asarray(row(params["bn2_g"])),
        "b2": jnp.asarray(row(params["bn2_b"])),
        "w3": jnp.asarray(np.asarray(params["fc1_w"], np.float32).T),  # (in, out)
        "b3": jnp.asarray(row(params["fc1_b"])),
        "w4": jnp.asarray(np.asarray(params["fc2_w"], np.float32).T),
        "b4": jnp.asarray(row(params["fc2_b"])),
    }


# ----------------------------------------------------------------------------
# Forward wrapper: one pallas_call, everything resident in VMEM
# ----------------------------------------------------------------------------
def latent_discriminator_forward(x, prep):
    B = x.shape[0]
    x_flat = x.reshape(B, -1).astype(jnp.float32)       # (B, Cin*4*4) = (B, 128)
    n_attr = prep["w4"].shape[1]
    vmem = pl.BlockSpec(memory_space=pltpu.MemorySpace.VMEM)
    return pl.pallas_call(
        fused_forward_kernel,
        out_shape=jax.ShapeDtypeStruct((B, n_attr), jnp.float32),
        in_specs=[vmem] * 11,
        out_specs=vmem,
    )(x_flat, prep["w1"], prep["g1"], prep["b1"],
      prep["w2"], prep["g2"], prep["b2"],
      prep["w3"], prep["b3"], prep["w4"], prep["b4"])


# ----------------------------------------------------------------------------
# Pure-JAX reference (uses the ORIGINAL params incl. conv biases; batch-stat BN
# cancels them, which validates the bias-drop in the kernel path).
# ----------------------------------------------------------------------------
def reference_forward(x, params):
    def conv(x, w, b):
        y = jax.lax.conv_general_dilated(
            x, w, (2, 2), ((1, 1), (1, 1)),
            dimension_numbers=("NCHW", "OIHW", "NCHW"))
        return y + b[None, :, None, None]

    def bn(y, g, be):
        mean = y.mean(axis=(0, 2, 3), keepdims=True)
        var = ((y - mean) ** 2).mean(axis=(0, 2, 3), keepdims=True)
        return (y - mean) / jnp.sqrt(var + 1e-5) * g[None, :, None, None] \
            + be[None, :, None, None]

    def lrelu(y, s=0.2):
        return jnp.where(y >= 0.0, y, s * y)

    h = lrelu(bn(conv(x, params["conv1_w"], params["conv1_b"]),
                 params["bn1_g"], params["bn1_b"]))
    h = lrelu(bn(conv(h, params["conv2_w"], params["conv2_b"]),
                 params["bn2_g"], params["bn2_b"]))
    h = h.reshape(x.shape[0], -1)
    h = lrelu(h @ params["fc1_w"].T + params["fc1_b"])
    return h @ params["fc2_w"].T + params["fc2_b"]


# ----------------------------------------------------------------------------
# Deterministic parameter init + main
# ----------------------------------------------------------------------------
def init_model_params(key, conv_in_fm, conv_mid_fm, conv_out_fm, hid_dim, n_attr):
    keys = jax.random.split(key, 8)

    def uni(k, shape, fan_in):
        bound = 1.0 / (fan_in ** 0.5)
        return jax.random.uniform(k, shape, jnp.float32, -bound, bound)

    return {
        "conv1_w": uni(keys[0], (conv_mid_fm, conv_in_fm, 4, 4), conv_in_fm * 16),
        "conv1_b": uni(keys[1], (conv_mid_fm,), conv_in_fm * 16),
        "bn1_g": jnp.ones((conv_mid_fm,), jnp.float32),
        "bn1_b": jnp.zeros((conv_mid_fm,), jnp.float32),
        "conv2_w": uni(keys[2], (conv_out_fm, conv_mid_fm, 4, 4), conv_mid_fm * 16),
        "conv2_b": uni(keys[3], (conv_out_fm,), conv_mid_fm * 16),
        "bn2_g": jnp.ones((conv_out_fm,), jnp.float32),
        "bn2_b": jnp.zeros((conv_out_fm,), jnp.float32),
        "fc1_w": uni(keys[4], (hid_dim, conv_out_fm), conv_out_fm),
        "fc1_b": uni(keys[5], (hid_dim,), conv_out_fm),
        "fc2_w": uni(keys[6], (n_attr, hid_dim), hid_dim),
        "fc2_b": uni(keys[7], (n_attr,), hid_dim),
    }


if __name__ == "__main__":
    # Derived LatentDiscriminator config (img_sz=16, img_fm=3, init_fm=4,
    # max_fm=32, n_layers=2, n_skip=0, hid_dim=32, n_attr=2, lat_dis_dropout=0):
    # conv_in_fm=8, conv_in_sz=4, conv layers = [Conv(8->16)+BN+LReLU,
    # Conv(16->32)+BN+LReLU], proj = Linear(32,32)+LReLU+Linear(32,2).
    B = 2
    conv_in_fm, conv_in_sz = 8, 4
    conv_mid_fm, conv_out_fm = 16, 32
    hid_dim, n_attr = 32, 2

    root = jax.random.PRNGKey(0)
    k_x, k_p = jax.random.split(root)
    x = jax.random.normal(k_x, (B, conv_in_fm, conv_in_sz, conv_in_sz), jnp.float32)
    params = init_model_params(k_p, conv_in_fm, conv_mid_fm, conv_out_fm,
                               hid_dim, n_attr)

    prep = prepare_params(params, conv_in_sz)           # one-time weight prep
    fwd = jax.jit(latent_discriminator_forward)

    out = jax.block_until_ready(fwd(x, prep))
    assert out.shape == (B, n_attr), out.shape

    ref = jax.block_until_ready(reference_forward(x, params))
    assert jnp.allclose(out, ref, atol=1e-2, rtol=1e-2), (out, ref)

    print("KERNEL_OK")
</pallas_src>

<mosaic_0001>
module attributes {stable_mosaic.version = 11 : i64} {
  func.func @fused_forward_kernel(%arg0: memref<2x128xf32, #tpu.memory_space<vmem>>, %arg1: memref<128x64xf32, #tpu.memory_space<vmem>>, %arg2: memref<1x64xf32, #tpu.memory_space<vmem>>, %arg3: memref<1x64xf32, #tpu.memory_space<vmem>>, %arg4: memref<64x32xf32, #tpu.memory_space<vmem>>, %arg5: memref<1x32xf32, #tpu.memory_space<vmem>>, %arg6: memref<1x32xf32, #tpu.memory_space<vmem>>, %arg7: memref<32x32xf32, #tpu.memory_space<vmem>>, %arg8: memref<1x32xf32, #tpu.memory_space<vmem>>, %arg9: memref<32x2xf32, #tpu.memory_space<vmem>>, %arg10: memref<1x2xf32, #tpu.memory_space<vmem>>, %arg11: memref<2x2xf32, #tpu.memory_space<vmem>>) attributes {dimension_semantics = [], scalar_prefetch = 0 : i64, scratch_operands = 0 : i64, tpu.core_type = #tpu.core_type<tc>} {
    %c0 = arith.constant 0 : index
    %c0_0 = arith.constant 0 : index
    %0 = vector.load %arg0[%c0, %c0_0] : memref<2x128xf32, #tpu.memory_space<vmem>>, vector<2x128xf32>
    %c0_1 = arith.constant 0 : index
    %c0_2 = arith.constant 0 : index
    %1 = vector.load %arg1[%c0_1, %c0_2] : memref<128x64xf32, #tpu.memory_space<vmem>>, vector<128x64xf32>
    %cst = arith.constant dense<0.000000e+00> : vector<2x64xf32>
    %2 = tpu.matmul %0, %1, %cst {dimension_numbers = #tpu.dot_dimension_numbers<[1], [0], [0], [1], [0, 0, 1, 1], [], []>} : vector<2x128xf32>, vector<128x64xf32>, vector<2x64xf32> -> vector<2x64xf32>
    %cst_3 = arith.constant dense<0.000000e+00> : vector<64xf32>
    %3 = vector.multi_reduction <add>, %2, %cst_3 [0] : vector<2x64xf32> to vector<64xf32>
    %4 = vector.shape_cast %3 : vector<64xf32> to vector<1x64xf32>
    %5 = arith.mulf %2, %2 : vector<2x64xf32>
    %cst_4 = arith.constant dense<0.000000e+00> : vector<64xf32>
    %6 = vector.multi_reduction <add>, %5, %cst_4 [0] : vector<2x64xf32> to vector<64xf32>
    %7 = vector.shape_cast %6 : vector<64xf32> to vector<1x64xf32>
    %8 = tpu.iota {dimensions = array<i32: 0>} : vector<64x64xi32>
    %9 = tpu.iota {dimensions = array<i32: 1>} : vector<64x64xi32>
    %c16_i32 = arith.constant 16 : i32
    %c0_i32 = arith.constant 0 : i32
    %10 = arith.cmpi eq, %c16_i32, %c0_i32 : i32
    %c1_i32 = arith.constant 1 : i32
    %11 = arith.select %10, %c1_i32, %c16_i32 : i32
    %12 = vector.broadcast %11 : i32 to vector<64x64xi32>
    %13 = arith.remsi %8, %12 : vector<64x64xi32>
    %c0_i32_5 = arith.constant 0 : i32
    %14 = vector.broadcast %c0_i32_5 : i32 to vector<64x64xi32>
    %15 = arith.cmpi ne, %13, %14 : vector<64x64xi32>
    %c0_i32_6 = arith.constant 0 : i32
    %16 = vector.broadcast %c0_i32_6 : i32 to vector<64x64xi32>
    %17 = arith.cmpi slt, %13, %16 : vector<64x64xi32>
    %c0_i32_7 = arith.constant 0 : i32
    %18 = arith.cmpi slt, %11, %c0_i32_7 : i32
    %19 = vector.broadcast %18 : i1 to vector<64x64xi1>
    %20 = vector.broadcast %19 : vector<64x64xi1> to vector<64x64xi1>
    %21 = arith.xori %17, %20 : vector<64x64xi1>
    %22 = arith.andi %21, %15 : vector<64x64xi1>
    %23 = vector.broadcast %11 : i32 to vector<64x64xi32>
    %24 = arith.addi %13, %23 : vector<64x64xi32>
    %25 = arith.select %22, %24, %13 : vector<64x64xi1>, vector<64x64xi32>
    %c16_i32_8 = arith.constant 16 : i32
    %c0_i32_9 = arith.constant 0 : i32
    %26 = arith.cmpi eq, %c16_i32_8, %c0_i32_9 : i32
    %c1_i32_10 = arith.constant 1 : i32
    %27 = arith.select %26, %c1_i32_10, %c16_i32_8 : i32
    %28 = vector.broadcast %27 : i32 to vector<64x64xi32>
    %29 = arith.remsi %9, %28 : vector<64x64xi32>
    %c0_i32_11 = arith.constant 0 : i32
    %30 = vector.broadcast %c0_i32_11 : i32 to vector<64x64xi32>
    %31 = arith.cmpi ne, %29, %30 : vector<64x64xi32>
    %c0_i32_12 = arith.constant 0 : i32
    %32 = vector.broadcast %c0_i32_12 : i32 to vector<64x64xi32>
    %33 = arith.cmpi slt, %29, %32 : vector<64x64xi32>
    %c0_i32_13 = arith.constant 0 : i32
    %34 = arith.cmpi slt, %27, %c0_i32_13 : i32
    %35 = vector.broadcast %34 : i1 to vector<64x64xi1>
    %36 = vector.broadcast %35 : vector<64x64xi1> to vector<64x64xi1>
    %37 = arith.xori %33, %36 : vector<64x64xi1>
    %38 = arith.andi %37, %31 : vector<64x64xi1>
    %39 = vector.broadcast %27 : i32 to vector<64x64xi32>
    %40 = arith.addi %29, %39 : vector<64x64xi32>
    %41 = arith.select %38, %40, %29 : vector<64x64xi1>, vector<64x64xi32>
    %42 = arith.cmpi eq, %25, %41 : vector<64x64xi32>
    %43 = arith.extui %42 : vector<64x64xi1> to vector<64x64xi32>
    %44 = arith.sitofp %43 : vector<64x64xi32> to vector<64x64xf32>
    %cst_14 = arith.constant 1.250000e-01 : f32
    %45 = vector.broadcast %cst_14 : f32 to vector<64x64xf32>
    %46 = arith.mulf %44, %45 : vector<64x64xf32>
    %cst_15 = arith.constant dense<0.000000e+00> : vector<1x64xf32>
    %47 = tpu.matmul %4, %46, %cst_15 {dimension_numbers = #tpu.dot_dimension_numbers<[1], [0], [0], [1], [0, 0, 1, 1], [], []>} : vector<1x64xf32>, vector<64x64xf32>, vector<1x64xf32> -> vector<1x64xf32>
    %cst_16 = arith.constant dense<0.000000e+00> : vector<1x64xf32>
    %48 = tpu.matmul %7, %46, %cst_16 {dimension_numbers = #tpu.dot_dimension_numbers<[1], [0], [0], [1], [0, 0, 1, 1], [], []>} : vector<1x64xf32>, vector<64x64xf32>, vector<1x64xf32> -> vector<1x64xf32>
    %49 = arith.mulf %47, %47 : vector<1x64xf32>
    %50 = arith.subf %48, %49 : vector<1x64xf32>
    %cst_17 = arith.constant 9.99999974E-6 : f32
    %51 = vector.broadcast %cst_17 : f32 to vector<1x64xf32>
    %52 = arith.addf %50, %51 : vector<1x64xf32>
    %53 = math.rsqrt %52 : vector<1x64xf32>
    %c0_18 = arith.constant 0 : index
    %c0_19 = arith.constant 0 : index
    %54 = vector.load %arg2[%c0_18, %c0_19] : memref<1x64xf32, #tpu.memory_space<vmem>>, vector<1x64xf32>
    %55 = arith.mulf %53, %54 : vector<1x64xf32>
    %c0_20 = arith.constant 0 : index
    %c0_21 = arith.constant 0 : index
    %56 = vector.load %arg3[%c0_20, %c0_21] : memref<1x64xf32, #tpu.memory_space<vmem>>, vector<1x64xf32>
    %57 = arith.mulf %47, %55 : vector<1x64xf32>
    %58 = arith.subf %56, %57 : vector<1x64xf32>
    %59 = vector.broadcast %55 : vector<1x64xf32> to vector<2x64xf32>
    %60 = arith.mulf %2, %59 : vector<2x64xf32>
    %61 = vector.broadcast %58 : vector<1x64xf32> to vector<2x64xf32>
    %62 = arith.addf %60, %61 : vector<2x64xf32>
    %cst_22 = arith.constant 0.000000e+00 : f32
    %63 = vector.broadcast %cst_22 : f32 to vector<2x64xf32>
    %64 = arith.cmpf oge, %62, %63 : vector<2x64xf32>
    %cst_23 = arith.constant 2.000000e-01 : f32
    %65 = vector.broadcast %cst_23 : f32 to vector<2x64xf32>
    %66 = arith.mulf %65, %62 : vector<2x64xf32>
    %67 = arith.select %64, %62, %66 : vector<2x64xi1>, vector<2x64xf32>
    %c0_24 = arith.constant 0 : index
    %c0_25 = arith.constant 0 : index
    %68 = vector.load %arg4[%c0_24, %c0_25] : memref<64x32xf32, #tpu.memory_space<vmem>>, vector<64x32xf32>
    %cst_26 = arith.constant dense<0.000000e+00> : vector<2x32xf32>
    %69 = tpu.matmul %67, %68, %cst_26 {dimension_numbers = #tpu.dot_dimension_numbers<[1], [0], [0], [1], [0, 0, 1, 1], [], []>} : vector<2x64xf32>, vector<64x32xf32>, vector<2x32xf32> -> vector<2x32xf32>
    %cst_27 = arith.constant dense<0.000000e+00> : vector<32xf32>
    %70 = vector.multi_reduction <add>, %69, %cst_27 [0] : vector<2x32xf32> to vector<32xf32>
    %71 = vector.shape_cast %70 : vector<32xf32> to vector<1x32xf32>
    %cst_28 = arith.constant 5.000000e-01 : f32
    %72 = vector.broadcast %cst_28 : f32 to vector<1x32xf32>
    %73 = arith.mulf %71, %72 : vector<1x32xf32>
    %74 = arith.mulf %69, %69 : vector<2x32xf32>
    %cst_29 = arith.constant dense<0.000000e+00> : vector<32xf32>
    %75 = vector.multi_reduction <add>, %74, %cst_29 [0] : vector<2x32xf32> to vector<32xf32>
    %76 = vector.shape_cast %75 : vector<32xf32> to vector<1x32xf32>
    %cst_30 = arith.constant 5.000000e-01 : f32
    %77 = vector.broadcast %cst_30 : f32 to vector<1x32xf32>
    %78 = arith.mulf %76, %77 : vector<1x32xf32>
    %79 = arith.mulf %73, %73 : vector<1x32xf32>
    %80 = arith.subf %78, %79 : vector<1x32xf32>
    %cst_31 = arith.constant 9.99999974E-6 : f32
    %81 = vector.broadcast %cst_31 : f32 to vector<1x32xf32>
    %82 = arith.addf %80, %81 : vector<1x32xf32>
    %83 = math.rsqrt %82 : vector<1x32xf32>
    %c0_32 = arith.constant 0 : index
    %c0_33 = arith.constant 0 : index
    %84 = vector.load %arg5[%c0_32, %c0_33] : memref<1x32xf32, #tpu.memory_space<vmem>>, vector<1x32xf32>
    %85 = arith.mulf %83, %84 : vector<1x32xf32>
    %c0_34 = arith.constant 0 : index
    %c0_35 = arith.constant 0 : index
    %86 = vector.load %arg6[%c0_34, %c0_35] : memref<1x32xf32, #tpu.memory_space<vmem>>, vector<1x32xf32>
    %87 = arith.mulf %73, %85 : vector<1x32xf32>
    %88 = arith.subf %86, %87 : vector<1x32xf32>
    %89 = vector.broadcast %85 : vector<1x32xf32> to vector<2x32xf32>
    %90 = arith.mulf %69, %89 : vector<2x32xf32>
    %91 = vector.broadcast %88 : vector<1x32xf32> to vector<2x32xf32>
    %92 = arith.addf %90, %91 : vector<2x32xf32>
    %cst_36 = arith.constant 0.000000e+00 : f32
    %93 = vector.broadcast %cst_36 : f32 to vector<2x32xf32>
    %94 = arith.cmpf oge, %92, %93 : vector<2x32xf32>
    %cst_37 = arith.constant 2.000000e-01 : f32
    %95 = vector.broadcast %cst_37 : f32 to vector<2x32xf32>
    %96 = arith.mulf %95, %92 : vector<2x32xf32>
    %97 = arith.select %94, %92, %96 : vector<2x32xi1>, vector<2x32xf32>
    %c0_38 = arith.constant 0 : index
    %c0_39 = arith.constant 0 : index
    %98 = vector.load %arg7[%c0_38, %c0_39] : memref<32x32xf32, #tpu.memory_space<vmem>>, vector<32x32xf32>
    %cst_40 = arith.constant dense<0.000000e+00> : vector<2x32xf32>
    %99 = tpu.matmul %97, %98, %cst_40 {dimension_numbers = #tpu.dot_dimension_numbers<[1], [0], [0], [1], [0, 0, 1, 1], [], []>} : vector<2x32xf32>, vector<32x32xf32>, vector<2x32xf32> -> vector<2x32xf32>
    %c0_41 = arith.constant 0 : index
    %c0_42 = arith.constant 0 : index
    %100 = vector.load %arg8[%c0_41, %c0_42] : memref<1x32xf32, #tpu.memory_space<vmem>>, vector<1x32xf32>
    %101 = vector.broadcast %100 : vector<1x32xf32> to vector<2x32xf32>
    %102 = arith.addf %99, %101 : vector<2x32xf32>
    %cst_43 = arith.constant 0.000000e+00 : f32
    %103 = vector.broadcast %cst_43 : f32 to vector<2x32xf32>
    %104 = arith.cmpf oge, %102, %103 : vector<2x32xf32>
    %cst_44 = arith.constant 2.000000e-01 : f32
    %105 = vector.broadcast %cst_44 : f32 to vector<2x32xf32>
    %106 = arith.mulf %105, %102 : vector<2x32xf32>
    %107 = arith.select %104, %102, %106 : vector<2x32xi1>, vector<2x32xf32>
    %c0_45 = arith.constant 0 : index
    %c0_46 = arith.constant 0 : index
    %108 = vector.load %arg9[%c0_45, %c0_46] : memref<32x2xf32, #tpu.memory_space<vmem>>, vector<32x2xf32>
    %cst_47 = arith.constant dense<0.000000e+00> : vector<2x2xf32>
    %109 = tpu.matmul %107, %108, %cst_47 {dimension_numbers = #tpu.dot_dimension_numbers<[1], [0], [0], [1], [0, 0, 1, 1], [], []>} : vector<2x32xf32>, vector<32x2xf32>, vector<2x2xf32> -> vector<2x2xf32>
    %c0_48 = arith.constant 0 : index
    %c0_49 = arith.constant 0 : index
    %110 = vector.load %arg10[%c0_48, %c0_49] : memref<1x2xf32, #tpu.memory_space<vmem>>, vector<1x2xf32>
    %111 = vector.broadcast %110 : vector<1x2xf32> to vector<2x2xf32>
    %112 = arith.addf %109, %111 : vector<2x2xf32>
    %c0_50 = arith.constant 0 : index
    %c0_51 = arith.constant 0 : index
    %113 = vector.load %arg11[%c0_50, %c0_51] : memref<2x2xf32, #tpu.memory_space<vmem>>, vector<2x2xf32>
    tpu.vector_store %arg11[%c0_50, %c0_51], %112 {strides = array<i32>} : memref<2x2xf32, #tpu.memory_space<vmem>>, vector<2x2xf32>,
    return
  }
}

</mosaic_0001>

<llo_original>
// kernel: latent_discriminator_forward.1
$region0: #{latent_discriminator_forward.1}
  #allocation0 [shape = 'u32[]', space=smem, size = 0x4, offset = 0x4, fixed_abs, tag = 'smem constant byte address 0x4 - core index']
  #allocation1 [shape = 'u32[144,128]{1,0:T(1,128)}', space=vmem, size = 0x12000, scoped, tag = 'internal scratch']
  %s0 = inlined_call_operand.vmem [shape: f32[2,128], index: 0, kind: input, shape index: {}]
  %s1 = inlined_call_operand.vmem [shape: f32[128,64], index: 1, kind: input, shape index: {}]
  %s2 = inlined_call_operand.vmem [shape: f32[1,64], index: 2, kind: input, shape index: {}]
  %s3 = inlined_call_operand.vmem [shape: f32[1,64], index: 3, kind: input, shape index: {}]
  %s4 = inlined_call_operand.vmem [shape: f32[64,32], index: 4, kind: input, shape index: {}]
  %s5 = inlined_call_operand.vmem [shape: f32[1,32], index: 5, kind: input, shape index: {}]
  %s6 = inlined_call_operand.vmem [shape: f32[1,32], index: 6, kind: input, shape index: {}]
  %s7 = inlined_call_operand.vmem [shape: f32[32,32], index: 7, kind: input, shape index: {}]
  %s8 = inlined_call_operand.vmem [shape: f32[1,32], index: 8, kind: input, shape index: {}]
  %s9 = inlined_call_operand.vmem [shape: f32[32,2], index: 9, kind: input, shape index: {}]
  %s10 = inlined_call_operand.vmem [shape: f32[1,2], index: 10, kind: input, shape index: {}]
  %s11 = inlined_call_operand.hbm [shape: f32[2,2], index: 11, kind: output, shape index: {}]
  %s12 = sld [smem:[#allocation0]]
  $region54: #{latent_discriminator_forward.1} parent=0
    _
  %s14 = ssub.s32 1, %s12
  %s15 = scalar_select 0, %s14, %s12
  $region1: #{latent_discriminator_forward.1} parent=0
    #allocation2 [shape = 'u8[1024]{0}', space=vmem, size = 0x400, scoped, tag = 'output window, operand 0, single buffered']
    #allocation3 [shape = 's32[1]{0}', space=sflag, size = 0x4, scoped, tag = 'scoped memory for latent_discriminator_forward.1']
    %16 = vsyncpa [#allocation3], 0
    // Predicated region
    $region2: #{latent_discriminator_forward.1} parent=1 // pred_check
      _
    $region3: #{latent_discriminator_forward.1} parent=1 // pred_check_branch
      %18 = sbr.rel (0) target = $region5
    $region4: #{latent_discriminator_forward.1} parent=1 // pred_region
      _
    $region5: #{latent_discriminator_forward.1} parent=1 // pred_fallthru
      _
    // Predicated region
    $region6: #{latent_discriminator_forward.1} parent=1 // pred_check
      _
    $region7: #{latent_discriminator_forward.1} parent=1 // pred_check_branch
      %20 = sbr.rel (0) target = $region9
    $region8: #{latent_discriminator_forward.1} parent=1 // pred_region
      _
    $region9: #{latent_discriminator_forward.1} parent=1 // pred_fallthru
      _
    // Predicated region
    $region10: #{latent_discriminator_forward.1} parent=1 // pred_check
      _
    $region11: #{latent_discriminator_forward.1} parent=1 // pred_check_branch
      %22 = sbr.rel (0) target = $region13
    $region12: #{latent_discriminator_forward.1} parent=1 // pred_region
      _
    $region13: #{latent_discriminator_forward.1} parent=1 // pred_fallthru
      _
    // Predicated region
    $region14: #{latent_discriminator_forward.1} parent=1 // pred_check
      _
    $region15: #{latent_discriminator_forward.1} parent=1 // pred_check_branch
      %24 = sbr.rel (0) target = $region17
    $region16: #{latent_discriminator_forward.1} parent=1 // pred_region
      _
    $region17: #{latent_discriminator_forward.1} parent=1 // pred_fallthru
      _
    // Predicated region
    $region18: #{latent_discriminator_forward.1} parent=1 // pred_check
      _
    $region19: #{latent_discriminator_forward.1} parent=1 // pred_check_branch
      %26 = sbr.rel (0) target = $region21
    $region20: #{latent_discriminator_forward.1} parent=1 // pred_region
      _
    $region21: #{latent_discriminator_forward.1} parent=1 // pred_fallthru
      _
    // Predicated region
    $region22: #{latent_discriminator_forward.1} parent=1 // pred_check
      _
    $region23: #{latent_discriminator_forward.1} parent=1 // pred_check_branch
      %28 = sbr.rel (0) target = $region25
    $region24: #{latent_discriminator_forward.1} parent=1 // pred_region
      _
    $region25: #{latent_discriminator_forward.1} parent=1 // pred_fallthru
      _
    // Predicated region
    $region26: #{latent_discriminator_forward.1} parent=1 // pred_check
      _
    $region27: #{latent_discriminator_forward.1} parent=1 // pred_check_branch
      %30 = sbr.rel (0) target = $region29
    $region28: #{latent_discriminator_forward.1} parent=1 // pred_region
      _
    $region29: #{latent_discriminator_forward.1} parent=1 // pred_fallthru
      _
    // Predicated region
    $region30: #{latent_discriminator_forward.1} parent=1 // pred_check
      _
    $region31: #{latent_discriminator_forward.1} parent=1 // pred_check_branch
      %32 = sbr.rel (0) target = $region33
    $region32: #{latent_discriminator_forward.1} parent=1 // pred_region
      _
    $region33: #{latent_discriminator_forward.1} parent=1 // pred_fallthru
      _
    // Predicated region
    $region34: #{latent_discriminator_forward.1} parent=1 // pred_check
      _
    $region35: #{latent_discriminator_forward.1} parent=1 // pred_check_branch
      %34 = sbr.rel (0) target = $region37
    $region36: #{latent_discriminator_forward.1} parent=1 // pred_region
      _
    $region37: #{latent_discriminator_forward.1} parent=1 // pred_fallthru
      _
    // Predicated region
    $region38: #{latent_discriminator_forward.1} parent=1 // pred_check
      _
    $region39: #{latent_discriminator_forward.1} parent=1 // pred_check_branch
      %36 = sbr.rel (0) target = $region41
    $region40: #{latent_discriminator_forward.1} parent=1 // pred_region
      _
    $region41: #{latent_discriminator_forward.1} parent=1 // pred_fallthru
      _
    // Predicated region
    $region42: #{latent_discriminator_forward.1} parent=1 // pred_check
      _
    $region43: #{latent_discriminator_forward.1} parent=1 // pred_check_branch
      %38 = sbr.rel (0) target = $region45
    $region44: #{latent_discriminator_forward.1} parent=1 // pred_region
      _
    $region45: #{latent_discriminator_forward.1} parent=1 // pred_fallthru
      _
    %v39 = vld [vmem:[%s0] sm:$0x3]
    %v40 = vld [vmem:[%s1] sm:$0xff]
    %v41 = vld [vmem:[%s1 + $0x8] sm:$0xff]
    %v42 = vld [vmem:[%s1 + $0x10] sm:$0xff]
    %v43 = vld [vmem:[%s1 + $0x18] sm:$0xff]
    %v44 = vld [vmem:[%s1 + $0x20] sm:$0xff]
    %v45 = vld [vmem:[%s1 + $0x28] sm:$0xff]
    %v46 = vld [vmem:[%s1 + $0x30] sm:$0xff]
    %v47 = vld [vmem:[%s1 + $0x38] sm:$0xff]
    %v48 = vld [vmem:[%s1 + $0x40] sm:$0xff]
    %v49 = vld [vmem:[%s1 + $0x48] sm:$0xff]
    %v50 = vld [vmem:[%s1 + $0x50] sm:$0xff]
    %v51 = vld [vmem:[%s1 + $0x58] sm:$0xff]
    %v52 = vld [vmem:[%s1 + $0x60] sm:$0xff]
    %v53 = vld [vmem:[%s1 + $0x68] sm:$0xff]
    %v54 = vld [vmem:[%s1 + $0x70] sm:$0xff]
    %v55 = vld [vmem:[%s1 + $0x78] sm:$0xff]
    %56 = vmatprep.subr.mxu0 0.0
    %57 = vmatpush1.msra.mxu0 %v40
    %58 = vmatprep.subr.mxu0 0.0
    %59 = vmatpush1.msra.mxu0 %v41
    %60 = vmatprep.subr.mxu0 0.0
    %61 = vmatpush1.msra.mxu0 %v42
    %62 = vmatprep.subr.mxu0 0.0
    %63 = vmatpush1.msra.mxu0 %v43
    %64 = vmatprep.subr.mxu0 0.0
    %65 = vmatpush1.msra.mxu0 %v44
    %66 = vmatprep.subr.mxu0 0.0
    %67 = vmatpush1.msra.mxu0 %v45
    %68 = vmatprep.subr.mxu0 0.0
    %69 = vmatpush1.msra.mxu0 %v46
    %70 = vmatprep.subr.mxu0 0.0
    %71 = vmatpush1.msra.mxu0 %v47
    %72 = vmatprep.subr.mxu0 0.0
    %73 = vmatpush1.msra.mxu0 %v48
    %74 = vmatprep.subr.mxu0 0.0
    %75 = vmatpush1.msra.mxu0 %v49
    %76 = vmatprep.subr.mxu0 0.0
    %77 = vmatpush1.msra.mxu0 %v50
    %78 = vmatprep.subr.mxu0 0.0
    %79 = vmatpush1.msra.mxu0 %v51
    %80 = vmatprep.subr.mxu0 0.0
    %81 = vmatpush1.msra.mxu0 %v52
    %82 = vmatprep.subr.mxu0 0.0
    %83 = vmatpush1.msra.mxu0 %v53
    %84 = vmatprep.subr.mxu0 0.0
    %85 = vmatpush1.msra.mxu0 %v54
    %86 = vmatprep.subr.mxu0 0.0
    %87 = vmatpush1.msra.mxu0 %v55
    %88 = vmatprep.subr.mxu0 0.0
    %89 = vmatpush1.msra.mxu0 0.0
    %90 = vmatprep.subr.mxu0 0.0
    %91 = vmatpush1.msra.mxu0 0.0
    %92 = vmatprep.subr.mxu0 0.0
    %93 = vmatpush1.msra.mxu0 0.0
    %94 = vmatprep.subr.mxu0 0.0
    %95 = vmatpush1.msra.mxu0 0.0
    %96 = vmatprep.subr.mxu0 0.0
    %97 = vmatpush1.msra.mxu0 0.0
    %98 = vmatprep.subr.mxu0 0.0
    %99 = vmatpush1.msra.mxu0 0.0
    %100 = vmatprep.subr.mxu0 0.0
    %101 = vmatpush1.msra.mxu0 0.0
    %102 = vmatprep.subr.mxu0 0.0
    %103 = vmatpush1.msra.mxu0 0.0
    %104 = vmatprep.subr.mxu0 0.0
    %105 = vmatpush1.msra.mxu0 0.0
    %106 = vmatprep.subr.mxu0 0.0
    %107 = vmatpush1.msra.mxu0 0.0
    %108 = vmatprep.subr.mxu0 0.0
    %109 = vmatpush1.msra.mxu0 0.0
    %110 = vmatprep.subr.mxu0 0.0
    %111 = vmatpush1.msra.mxu0 0.0
    %112 = vmatprep.subr.mxu0 0.0
    %113 = vmatpush1.msra.mxu0 0.0
    %114 = vmatprep.subr.mxu0 0.0
    %115 = vmatpush1.msra.mxu0 0.0
    %116 = vmatprep.subr.mxu0 0.0
    %117 = vmatpush1.msra.mxu0 0.0
    %118 = vmatprep.subr.mxu0 0.0
    %119 = vmatpush1.msra.mxu0 0.0
    %120 = vmatprep.mubr.f32.mxu0 0.0
    %121 = vmatmul.mubr.f32.gmra.mrb[0].mxu0 %v39
    %v122 = vpop.f32.mrb[0].mxu0
    %v123 = vadd.f32 0.0, %v122
    %v124 = vpop.f32.mrb[0].mxu0
    %125 = vdwg.mxu0
    %vm126 = vcmask 517120
    %v127 = vsel %vm126, %v123, 0.0
    %v128 = vrot.slane %v127, 4
    %v129 = vadd.f32 %v127, %v128
    %v130 = vrot.slane %v129, 2
    %v131 = vadd.f32 %v129, %v130
    %v132 = vrot.slane %v131, 1
    %v133 = vadd.f32 %v131, %v132
    %v134 = vmul.f32 %v123, %v123
    %v135 = vsel %vm126, %v134, 0.0
    %v136 = vrot.slane %v135, 4
    %v137 = vadd.f32 %v135, %v136
    %v138 = vrot.slane %v137, 2
    %v139 = vadd.f32 %v137, %v138
    %v140 = vrot.slane %v139, 1
    %v141 = vadd.f32 %v139, %v140
    %v142 = vlaneseq
    %v143 = vshrl.u32 %v142, 7
    %v144 = vadd.s32 %v143, 8
    %v145 = vadd.s32 %v143, 16
    %v146 = vadd.s32 %v143, 24
    %v147 = vadd.s32 %v143, 32
    %v148 = vadd.s32 %v143, 40
    %v149 = vadd.s32 %v143, 48
    %v150 = vadd.s32 %v143, 56
    %v151 = vlaneseq
    %v152 = vand.u32 %v151, 127
    %vm153 = vcmp.lt.s32.totalorder %v143, 0
    %v154 = vsub.s32 0, %v143
    %v155 = vsel %vm153, %v154, %v143
    %v156 = vshrl.u32 %v155, 4
    %v157 = vand.u32 %v155, 15
    %v158 = vsub.s32 0, %v157
    %v159 = vsel %vm153, %v158, %v157
    %vm160 = vcmp.lt.s32.totalorder %v144, 0
    %v161 = vsub.s32 0, %v144
    %v162 = vsel %vm160, %v161, %v144
    %v163 = vshrl.u32 %v162, 4
    %v164 = vand.u32 %v162, 15
    %v165 = vsub.s32 0, %v164
    %v166 = vsel %vm160, %v165, %v164
    %vm167 = vcmp.lt.s32.totalorder %v145, 0
    %v168 = vsub.s32 0, %v145
    %v169 = vsel %vm167, %v168, %v145
    %v170 = vshrl.u32 %v169, 4
    %v171 = vand.u32 %v169, 15
    %v172 = vsub.s32 0, %v171
    %v173 = vsel %vm167, %v172, %v171
    %vm174 = vcmp.lt.s32.totalorder %v146, 0
    %v175 = vsub.s32 0, %v146
    %v176 = vsel %vm174, %v175, %v146
    %v177 = vshrl.u32 %v176, 4
    %v178 = vand.u32 %v176, 15
    %v179 = vsub.s32 0, %v178
    %v180 = vsel %vm174, %v179, %v178
    %vm181 = vcmp.lt.s32.totalorder %v147, 0
    %v182 = vsub.s32 0, %v147
    %v183 = vsel %vm181, %v182, %v147
    %v184 = vshrl.u32 %v183, 4
    %v185 = vand.u32 %v183, 15
    %v186 = vsub.s32 0, %v185
    %v187 = vsel %vm181, %v186, %v185
    %vm188 = vcmp.lt.s32.totalorder %v148, 0
    %v189 = vsub.s32 0, %v148
    %v190 = vsel %vm188, %v189, %v148
    %v191 = vshrl.u32 %v190, 4
    %v192 = vand.u32 %v190, 15
    %v193 = vsub.s32 0, %v192
    %v194 = vsel %vm188, %v193, %v192
    %vm195 = vcmp.lt.s32.totalorder %v149, 0
    %v196 = vsub.s32 0, %v149
    %v197 = vsel %vm195, %v196, %v149
    %v198 = vshrl.u32 %v197, 4
    %v199 = vand.u32 %v197, 15
    %v200 = vsub.s32 0, %v199
    %v201 = vsel %vm195, %v200, %v199
    %vm202 = vcmp.lt.s32.totalorder %v150, 0
    %v203 = vsub.s32 0, %v150
    %v204 = vsel %vm202, %v203, %v150
    %v205 = vshrl.u32 %v204, 4
    %v206 = vand.u32 %v204, 15
    %v207 = vsub.s32 0, %v206
    %v208 = vsel %vm202, %v207, %v206
    %vm209 = vcmp.ne.s32.totalorder %v159, 0
    %vm210 = vcmp.ne.s32.totalorder %v166, 0
    %vm211 = vcmp.ne.s32.totalorder %v173, 0
    %vm212 = vcmp.ne.s32.totalorder %v180, 0
    %vm213 = vcmp.ne.s32.totalorder %v187, 0
    %vm214 = vcmp.ne.s32.totalorder %v194, 0
    %vm215 = vcmp.ne.s32.totalorder %v201, 0
    %vm216 = vcmp.ne.s32.totalorder %v208, 0
    %vm217 = vcmp.lt.s32.totalorder %v159, 0
    %vm218 = vcmp.lt.s32.totalorder %v166, 0
    %vm219 = vcmp.lt.s32.totalorder %v173, 0
    %vm220 = vcmp.lt.s32.totalorder %v180, 0
    %vm221 = vcmp.lt.s32.totalorder %v187, 0
    %vm222 = vcmp.lt.s32.totalorder %v194, 0
    %vm223 = vcmp.lt.s32.totalorder %v201, 0
    %vm224 = vcmp.lt.s32.totalorder %v208, 0
    %vm225 = vmand %vm217, %vm209
    %vm226 = vmand %vm218, %vm210
    %vm227 = vmand %vm219, %vm211
    %vm228 = vmand %vm220, %vm212
    %vm229 = vmand %vm221, %vm213
    %vm230 = vmand %vm222, %vm214
    %vm231 = vmand %vm223, %vm215
    %vm232 = vmand %vm224, %vm216
    %v233 = vadd.s32 %v159, 16
    %v234 = vadd.s32 %v166, 16
    %v235 = vadd.s32 %v173, 16
    %v236 = vadd.s32 %v180, 16
    %v237 = vadd.s32 %v187, 16
    %v238 = vadd.s32 %v194, 16
    %v239 = vadd.s32 %v201, 16
    %v240 = vadd.s32 %v208, 16
    %v241 = vsel %vm225, %v233, %v159
    %v242 = vsel %vm226, %v234, %v166
    %v243 = vsel %vm227, %v235, %v173
    %v244 = vsel %vm228, %v236, %v180
    %v245 = vsel %vm229, %v237, %v187
    %v246 = vsel %vm230, %v238, %v194
    %v247 = vsel %vm231, %v239, %v201
    %v248 = vsel %vm232, %v240, %v208
    %vm249 = vcmp.lt.s32.totalorder %v152, 0
    %v250 = vsub.s32 0, %v152
    %v251 = vsel %vm249, %v250, %v152
    %v252 = vshrl.u32 %v251, 4
    %v253 = vand.u32 %v251, 15
    %v254 = vsub.s32 0, %v253
    %v255 = vsel %vm249, %v254, %v253
    %vm256 = vcmp.ne.s32.totalorder %v255, 0
    %vm257 = vcmp.lt.s32.totalorder %v255, 0
    %vm258 = vmand %vm257, %vm256
    %v259 = vadd.s32 %v255, 16
    %v260 = vsel %vm258, %v259, %v255
    %vm261 = vcmp.eq.s32.totalorder %v241, %v260
    %vm262 = vcmp.eq.s32.totalorder %v242, %v260
    %vm263 = vcmp.eq.s32.totalorder %v243, %v260
    %vm264 = vcmp.eq.s32.totalorder %v244, %v260
    %vm265 = vcmp.eq.s32.totalorder %v245, %v260
    %vm266 = vcmp.eq.s32.totalorder %v246, %v260
    %vm267 = vcmp.eq.s32.totalorder %v247, %v260
    %vm268 = vcmp.eq.s32.totalorder %v248, %v260
    %v269 = vsel %vm261, 1, 0
    %v270 = vsel %vm262, 1, 0
    %v271 = vsel %vm263, 1, 0
    %v272 = vsel %vm264, 1, 0
    %v273 = vsel %vm265, 1, 0
    %v274 = vsel %vm266, 1, 0
    %v275 = vsel %vm267, 1, 0
    %v276 = vsel %vm268, 1, 0
    %v277 = vcvt.s32.f32 %v269
    %v278 = vcvt.s32.f32 %v270
    %v279 = vcvt.s32.f32 %v271
    %v280 = vcvt.s32.f32 %v272
    %v281 = vcvt.s32.f32 %v273
    %v282 = vcvt.s32.f32 %v274
    %v283 = vcvt.s32.f32 %v275
    %v284 = vcvt.s32.f32 %v276
    %v285 = vmul.f32 %v277, 0.125
    %v286 = vmul.f32 %v278, 0.125
    %v287 = vmul.f32 %v279, 0.125
    %v288 = vmul.f32 %v280, 0.125
    %v289 = vmul.f32 %v281, 0.125
    %v290 = vmul.f32 %v282, 0.125
    %v291 = vmul.f32 %v283, 0.125
    %v292 = vmul.f32 %v284, 0.125
    %vm293 = vcmask 523264
    %v295 = vsel %vm293, %v133, 0
    %297 = vmatprep.subr.mxu0 0.0
    %298 = vmatpush1.msra.mxu0 %v285
    %299 = vmatprep.subr.mxu0 0.0
    %300 = vmatpush1.msra.mxu0 %v286
    %301 = vmatprep.subr.mxu0 0.0
    %302 = vmatpush1.msra.mxu0 %v287
    %303 = vmatprep.subr.mxu0 0.0
    %304 = vmatpush1.msra.mxu0 %v288
    %305 = vmatprep.subr.mxu0 0.0
    %306 = vmatpush1.msra.mxu0 %v289
    %307 = vmatprep.subr.mxu0 0.0
    %308 = vmatpush1.msra.mxu0 %v290
    %309 = vmatprep.subr.mxu0 0.0
    %310 = vmatpush1.msra.mxu0 %v291
    %311 = vmatprep.subr.mxu0 0.0
    %312 = vmatpush1.msra.mxu0 %v292
    %313 = vmatprep.subr.mxu0 0.0
    %314 = vmatpush1.msra.mxu0 0.0
    %315 = vmatprep.subr.mxu0 0.0
    %316 = vmatpush1.msra.mxu0 0.0
    %317 = vmatprep.subr.mxu0 0.0
    %318 = vmatpush1.msra.mxu0 0.0
    %319 = vmatprep.subr.mxu0 0.0
    %320 = vmatpush1.msra.mxu0 0.0
    %321 = vmatprep.subr.mxu0 0.0
    %322 = vmatpush1.msra.mxu0 0.0
    %323 = vmatprep.subr.mxu0 0.0
    %324 = vmatpush1.msra.mxu0 0.0
    %325 = vmatprep.subr.mxu0 0.0
    %326 = vmatpush1.msra.mxu0 0.0
    %327 = vmatprep.subr.mxu0 0.0
    %328 = vmatpush1.msra.mxu0 0.0
    %329 = vmatprep.subr.mxu0 0.0
    %330 = vmatpush1.msra.mxu0 0.0
    %331 = vmatprep.subr.mxu0 0.0
    %332 = vmatpush1.msra.mxu0 0.0
    %333 = vmatprep.subr.mxu0 0.0
    %334 = vmatpush1.msra.mxu0 0.0
    %335 = vmatprep.subr.mxu0 0.0
    %336 = vmatpush1.msra.mxu0 0.0
    %337 = vmatprep.subr.mxu0 0.0
    %338 = vmatpush1.msra.mxu0 0.0
    %339 = vmatprep.subr.mxu0 0.0
    %340 = vmatpush1.msra.mxu0 0.0
    %341 = vmatprep.subr.mxu0 0.0
    %342 = vmatpush1.msra.mxu0 0.0
    %343 = vmatprep.subr.mxu0 0.0
    %344 = vmatpush1.msra.mxu0 0.0
    %345 = vmatprep.subr.mxu0 0.0
    %346 = vmatpush1.msra.mxu0 0.0
    %347 = vmatprep.subr.mxu0 0.0
    %348 = vmatpush1.msra.mxu0 0.0
    %349 = vmatprep.subr.mxu0 0.0
    %350 = vmatpush1.msra.mxu0 0.0
    %351 = vmatprep.subr.mxu0 0.0
    %352 = vmatpush1.msra.mxu0 0.0
    %353 = vmatprep.subr.mxu0 0.0
    %354 = vmatpush1.msra.mxu0 0.0
    %355 = vmatprep.subr.mxu0 0.0
    %356 = vmatpush1.msra.mxu0 0.0
    %357 = vmatprep.subr.mxu0 0.0
    %358 = vmatpush1.msra.mxu0 0.0
    %359 = vmatprep.subr.mxu0 0.0
    %360 = vmatpush1.msra.mxu0 0.0
    %361 = vmatprep.mubr.f32.mxu0 0.0
    %362 = vmatmul.mubr.f32.gmra.mrb[0].mxu0 %v295
    %v363 = vpop.f32.mrb[0].mxu0
    %v364 = vadd.f32 0.0, %v363
    %v365 = vpop.f32.mrb[0].mxu0
    %366 = vdwg.mxu0
    %v368 = vsel %vm293, %v141, 0
    %370 = vmatprep.subr.mxu0 0.0
    %371 = vmatpush1.msra.mxu0 %v285
    %372 = vmatprep.subr.mxu0 0.0
    %373 = vmatpush1.msra.mxu0 %v286
    %374 = vmatprep.subr.mxu0 0.0
    %375 = vmatpush1.msra.mxu0 %v287
    %376 = vmatprep.subr.mxu0 0.0
    %377 = vmatpush1.msra.mxu0 %v288
    %378 = vmatprep.subr.mxu0 0.0
    %379 = vmatpush1.msra.mxu0 %v289
    %380 = vmatprep.subr.mxu0 0.0
    %381 = vmatpush1.msra.mxu0 %v290
    %382 = vmatprep.subr.mxu0 0.0
    %383 = vmatpush1.msra.mxu0 %v291
    %384 = vmatprep.subr.mxu0 0.0
    %385 = vmatpush1.msra.mxu0 %v292
    %386 = vmatprep.subr.mxu0 0.0
    %387 = vmatpush1.msra.mxu0 0.0
    %388 = vmatprep.subr.mxu0 0.0
    %389 = vmatpush1.msra.mxu0 0.0
    %390 = vmatprep.subr.mxu0 0.0
    %391 = vmatpush1.msra.mxu0 0.0
    %392 = vmatprep.subr.mxu0 0.0
    %393 = vmatpush1.msra.mxu0 0.0
    %394 = vmatprep.subr.mxu0 0.0
    %395 = vmatpush1.msra.mxu0 0.0
    %396 = vmatprep.subr.mxu0 0.0
    %397 = vmatpush1.msra.mxu0 0.0
    %398 = vmatprep.subr.mxu0 0.0
    %399 = vmatpush1.msra.mxu0 0.0
    %400 = vmatprep.subr.mxu0 0.0
    %401 = vmatpush1.msra.mxu0 0.0
    %402 = vmatprep.subr.mxu0 0.0
    %403 = vmatpush1.msra.mxu0 0.0
    %404 = vmatprep.subr.mxu0 0.0
    %405 = vmatpush1.msra.mxu0 0.0
    %406 = vmatprep.subr.mxu0 0.0
    %407 = vmatpush1.msra.mxu0 0.0
    %408 = vmatprep.subr.mxu0 0.0
    %409 = vmatpush1.msra.mxu0 0.0
    %410 = vmatprep.subr.mxu0 0.0
    %411 = vmatpush1.msra.mxu0 0.0
    %412 = vmatprep.subr.mxu0 0.0
    %413 = vmatpush1.msra.mxu0 0.0
    %414 = vmatprep.subr.mxu0 0.0
    %415 = vmatpush1.msra.mxu0 0.0
    %416 = vmatprep.subr.mxu0 0.0
    %417 = vmatpush1.msra.mxu0 0.0
    %418 = vmatprep.subr.mxu0 0.0
    %419 = vmatpush1.msra.mxu0 0.0
    %420 = vmatprep.subr.mxu0 0.0
    %421 = vmatpush1.msra.mxu0 0.0
    %422 = vmatprep.subr.mxu0 0.0
    %423 = vmatpush1.msra.mxu0 0.0
    %424 = vmatprep.subr.mxu0 0.0
    %425 = vmatpush1.msra.mxu0 0.0
    %426 = vmatprep.subr.mxu0 0.0
    %427 = vmatpush1.msra.mxu0 0.0
    %428 = vmatprep.subr.mxu0 0.0
    %429 = vmatpush1.msra.mxu0 0.0
    %430 = vmatprep.subr.mxu0 0.0
    %431 = vmatpush1.msra.mxu0 0.0
    %432 = vmatprep.subr.mxu0 0.0
    %433 = vmatpush1.msra.mxu0 0.0
    %434 = vmatprep.mubr.f32.mxu0 0.0
    %435 = vmatmul.mubr.f32.gmra.mrb[0].mxu0 %v368
    %v436 = vpop.f32.mrb[0].mxu0
    %v437 = vadd.f32 0.0, %v436
    %v438 = vpop.f32.mrb[0].mxu0
    %439 = vdwg.mxu0
    %v440 = vmul.f32 %v364, %v364
    %v441 = vsub.f32 %v437, %v440
    %v442 = vadd.f32 %v441, 1e-05
    %v443 = vrsqrt.pop %v442
    %v444 = vld [vmem:[%s2] sm:$0x1]
    %v445 = vmul.f32 %v443, %v444
    %v446 = vld [vmem:[%s3] sm:$0x1]
    %v447 = vmul.f32 %v364, %v445
    %v448 = vsub.f32 %v446, %v447
    %v449 = vlaneseq
    %v450 = vshrl.u32 %v449, 7
    %v451 = vsub.s32 0, %v450
    %v452 = vrot.slane %v445, %v451
    %v453 = vmul.f32 %v123, %v452
    %v455 = vlaneseq
    %v456 = vshrl.u32 %v455, 7
    %v457 = vsub.s32 0, %v456
    %v458 = vrot.slane %v448, %v457
    %v460 = vadd.f32 %v453, %v458
    %vm461 = vcmp.ge.f32.partialorder %v460, 0.0
    %v462 = vmul.f32 %v460, 0.2
    %v463 = vsel %vm461, %v460, %v462
    %v464 = vld [vmem:[%s4] sm:$0xff]
    %v465 = vld [vmem:[%s4 + $0x8] sm:$0xff]
    %v466 = vld [vmem:[%s4 + $0x10] sm:$0xff]
    %v467 = vld [vmem:[%s4 + $0x18] sm:$0xff]
    %v468 = vld [vmem:[%s4 + $0x20] sm:$0xff]
    %v469 = vld [vmem:[%s4 + $0x28] sm:$0xff]
    %v470 = vld [vmem:[%s4 + $0x30] sm:$0xff]
    %v471 = vld [vmem:[%s4 + $0x38] sm:$0xff]
    %v473 = vsel %vm293, %v463, 0
    %475 = vmatprep.subr.mxu0 0.0
    %476 = vmatpush1.msra.mxu0 %v464
    %477 = vmatprep.subr.mxu0 0.0
    %478 = vmatpush1.msra.mxu0 %v465
    %479 = vmatprep.subr.mxu0 0.0
    %480 = vmatpush1.msra.mxu0 %v466
    %481 = vmatprep.subr.mxu0 0.0
    %482 = vmatpush1.msra.mxu0 %v467
    %483 = vmatprep.subr.mxu0 0.0
    %484 = vmatpush1.msra.mxu0 %v468
    %485 = vmatprep.subr.mxu0 0.0
    %486 = vmatpush1.msra.mxu0 %v469
    %487 = vmatprep.subr.mxu0 0.0
    %488 = vmatpush1.msra.mxu0 %v470
    %489 = vmatprep.subr.mxu0 0.0
    %490 = vmatpush1.msra.mxu0 %v471
    %491 = vmatprep.subr.mxu0 0.0
    %492 = vmatpush1.msra.mxu0 0.0
    %493 = vmatprep.subr.mxu0 0.0
    %494 = vmatpush1.msra.mxu0 0.0
    %495 = vmatprep.subr.mxu0 0.0
    %496 = vmatpush1.msra.mxu0 0.0
    %497 = vmatprep.subr.mxu0 0.0
    %498 = vmatpush1.msra.mxu0 0.0
    %499 = vmatprep.subr.mxu0 0.0
    %500 = vmatpush1.msra.mxu0 0.0
    %501 = vmatprep.subr.mxu0 0.0
    %502 = vmatpush1.msra.mxu0 0.0
    %503 = vmatprep.subr.mxu0 0.0
    %504 = vmatpush1.msra.mxu0 0.0
    %505 = vmatprep.subr.mxu0 0.0
    %506 = vmatpush1.msra.mxu0 0.0
    %507 = vmatprep.subr.mxu0 0.0
    %508 = vmatpush1.msra.mxu0 0.0
    %509 = vmatprep.subr.mxu0 0.0
    %510 = vmatpush1.msra.mxu0 0.0
    %511 = vmatprep.subr.mxu0 0.0
    %512 = vmatpush1.msra.mxu0 0.0
    %513 = vmatprep.subr.mxu0 0.0
    %514 = vmatpush1.msra.mxu0 0.0
    %515 = vmatprep.subr.mxu0 0.0
    %516 = vmatpush1.msra.mxu0 0.0
    %517 = vmatprep.subr.mxu0 0.0
    %518 = vmatpush1.msra.mxu0 0.0
    %519 = vmatprep.subr.mxu0 0.0
    %520 = vmatpush1.msra.mxu0 0.0
    %521 = vmatprep.subr.mxu0 0.0
    %522 = vmatpush1.msra.mxu0 0.0
    %523 = vmatprep.subr.mxu0 0.0
    %524 = vmatpush1.msra.mxu0 0.0
    %525 = vmatprep.subr.mxu0 0.0
    %526 = vmatpush1.msra.mxu0 0.0
    %527 = vmatprep.subr.mxu0 0.0
    %528 = vmatpush1.msra.mxu0 0.0
    %529 = vmatprep.subr.mxu0 0.0
    %530 = vmatpush1.msra.mxu0 0.0
    %531 = vmatprep.subr.mxu0 0.0
    %532 = vmatpush1.msra.mxu0 0.0
    %533 = vmatprep.subr.mxu0 0.0
    %534 = vmatpush1.msra.mxu0 0.0
    %535 = vmatprep.subr.mxu0 0.0
    %536 = vmatpush1.msra.mxu0 0.0
    %537 = vmatprep.subr.mxu0 0.0
    %538 = vmatpush1.msra.mxu0 0.0
    %539 = vmatprep.mubr.f32.mxu0 0.0
    %540 = vmatmul.mubr.f32.gmra.mrb[0].mxu0 %v473
    %v541 = vpop.f32.mrb[0].mxu0
    %v542 = vadd.f32 0.0, %v541
    %v543 = vpop.f32.mrb[0].mxu0
    %544 = vdwg.mxu0
    %vm545 = vcmask 254976
    %v546 = vsel %vm545, %v542, 0.0
    %v547 = vrot.slane %v546, 4
    %v548 = vadd.f32 %v546, %v547
    %v549 = vrot.slane %v548, 2
    %v550 = vadd.f32 %v548, %v549
    %v551 = vrot.slane %v550, 1
    %v552 = vadd.f32 %v550, %v551
    %v553 = vmul.f32 %v552, 0.5
    %v554 = vmul.f32 %v542, %v542
    %v555 = vsel %vm545, %v554, 0.0
    %v556 = vrot.slane %v555, 4
    %v557 = vadd.f32 %v555, %v556
    %v558 = vrot.slane %v557, 2
    %v559 = vadd.f32 %v557, %v558
    %v560 = vrot.slane %v559, 1
    %v561 = vadd.f32 %v559, %v560
    %v562 = vmul.f32 %v561, 0.5
    %v563 = vmul.f32 %v553, %v553
    %v564 = vsub.f32 %v562, %v563
    %v565 = vadd.f32 %v564, 1e-05
    %v566 = vrsqrt.pop %v565
    %v567 = vld [vmem:[%s5] sm:$0x1]
    %v568 = vmul.f32 %v566, %v567
    %v569 = vld [vmem:[%s6] sm:$0x1]
    %v570 = vmul.f32 %v553, %v568
    %v571 = vsub.f32 %v569, %v570
    %v572 = vlaneseq
    %v573 = vshrl.u32 %v572, 7
    %v574 = vsub.s32 0, %v573
    %v575 = vrot.slane %v568, %v574
    %v576 = vmul.f32 %v542, %v575
    %v578 = vlaneseq
    %v579 = vshrl.u32 %v578, 7
    %v580 = vsub.s32 0, %v579
    %v581 = vrot.slane %v571, %v580
    %v583 = vadd.f32 %v576, %v581
    %vm584 = vcmp.ge.f32.partialorder %v583, 0.0
    %v585 = vmul.f32 %v583, 0.2
    %v586 = vsel %vm584, %v583, %v585
    %v587 = vld [vmem:[%s7] sm:$0xff]
    %v588 = vld [vmem:[%s7 + $0x8] sm:$0xff]
    %v589 = vld [vmem:[%s7 + $0x10] sm:$0xff]
    %v590 = vld [vmem:[%s7 + $0x18] sm:$0xff]
    %v591 = vld [vmem:[%s8] sm:$0x1]
    %v593 = vlaneseq
    %v594 = vshrl.u32 %v593, 7
    %v595 = vsub.s32 0, %v594
    %v596 = vrot.slane %v591, %v595
    %vm598 = vcmask 261120
    %v600 = vsel %vm598, %v586, 0
    %602 = vmatprep.subr.mxu0 0.0
    %603 = vmatpush1.msra.mxu0 %v587
    %604 = vmatprep.subr.mxu0 0.0
    %605 = vmatpush1.msra.mxu0 %v588
    %606 = vmatprep.subr.mxu0 0.0
    %607 = vmatpush1.msra.mxu0 %v589
    %608 = vmatprep.subr.mxu0 0.0
    %609 = vmatpush1.msra.mxu0 %v590
    %610 = vmatprep.subr.mxu0 0.0
    %611 = vmatpush1.msra.mxu0 0.0
    %612 = vmatprep.subr.mxu0 0.0
    %613 = vmatpush1.msra.mxu0 0.0
    %614 = vmatprep.subr.mxu0 0.0
    %615 = vmatpush1.msra.mxu0 0.0
    %616 = vmatprep.subr.mxu0 0.0
    %617 = vmatpush1.msra.mxu0 0.0
    %618 = vmatprep.subr.mxu0 0.0
    %619 = vmatpush1.msra.mxu0 0.0
    %620 = vmatprep.subr.mxu0 0.0
    %621 = vmatpush1.msra.mxu0 0.0
    %622 = vmatprep.subr.mxu0 0.0
    %623 = vmatpush1.msra.mxu0 0.0
    %624 = vmatprep.subr.mxu0 0.0
    %625 = vmatpush1.msra.mxu0 0.0
    %626 = vmatprep.subr.mxu0 0.0
    %627 = vmatpush1.msra.mxu0 0.0
    %628 = vmatprep.subr.mxu0 0.0
    %629 = vmatpush1.msra.mxu0 0.0
    %630 = vmatprep.subr.mxu0 0.0
    %631 = vmatpush1.msra.mxu0 0.0
    %632 = vmatprep.subr.mxu0 0.0
    %633 = vmatpush1.msra.mxu0 0.0
    %634 = vmatprep.subr.mxu0 0.0
    %635 = vmatpush1.msra.mxu0 0.0
    %636 = vmatprep.subr.mxu0 0.0
    %637 = vmatpush1.msra.mxu0 0.0
    %638 = vmatprep.subr.mxu0 0.0
    %639 = vmatpush1.msra.mxu0 0.0
    %640 = vmatprep.subr.mxu0 0.0
    %641 = vmatpush1.msra.mxu0 0.0
    %642 = vmatprep.subr.mxu0 0.0
    %643 = vmatpush1.msra.mxu0 0.0
    %644 = vmatprep.subr.mxu0 0.0
    %645 = vmatpush1.msra.mxu0 0.0
    %646 = vmatprep.subr.mxu0 0.0
    %647 = vmatpush1.msra.mxu0 0.0
    %648 = vmatprep.subr.mxu0 0.0
    %649 = vmatpush1.msra.mxu0 0.0
    %650 = vmatprep.subr.mxu0 0.0
    %651 = vmatpush1.msra.mxu0 0.0
    %652 = vmatprep.subr.mxu0 0.0
    %653 = vmatpush1.msra.mxu0 0.0
    %654 = vmatprep.subr.mxu0 0.0
    %655 = vmatpush1.msra.mxu0 0.0
    %656 = vmatprep.subr.mxu0 0.0
    %657 = vmatpush1.msra.mxu0 0.0
    %658 = vmatprep.subr.mxu0 0.0
    %659 = vmatpush1.msra.mxu0 0.0
    %660 = vmatprep.subr.mxu0 0.0
    %661 = vmatpush1.msra.mxu0 0.0
    %662 = vmatprep.subr.mxu0 0.0
    %663 = vmatpush1.msra.mxu0 0.0
    %664 = vmatprep.subr.mxu0 0.0
    %665 = vmatpush1.msra.mxu0 0.0
    %666 = vmatprep.mubr.f32.mxu0 0.0
    %667 = vmatmul.mubr.f32.gmra.mrb[0].mxu0 %v600
    %v668 = vpop.f32.mrb[0].mxu0
    %v669 = vadd.f32 %v596, %v668
    %v670 = vpop.f32.mrb[0].mxu0
    %671 = vdwg.mxu0
    %vm672 = vcmp.ge.f32.partialorder %v669, 0.0
    %v673 = vmul.f32 %v669, 0.2
    %v674 = vsel %vm672, %v669, %v673
    %v675 = vld [vmem:[%s9] sm:$0xff]
    %v676 = vld [vmem:[%s9 + $0x8] sm:$0xff]
    %v677 = vld [vmem:[%s9 + $0x10] sm:$0xff]
    %v678 = vld [vmem:[%s9 + $0x18] sm:$0xff]
    %v679 = vld [vmem:[%s10] sm:$0x1]
    %v681 = vlaneseq
    %v682 = vshrl.u32 %v681, 7
    %v683 = vsub.s32 0, %v682
    %v684 = vrot.slane %v679, %v683
    %v687 = vsel %vm598, %v674, 0
    %689 = vmatprep.subr.mxu0 0.0
    %690 = vmatpush1.msra.mxu0 %v675
    %691 = vmatprep.subr.mxu0 0.0
    %692 = vmatpush1.msra.mxu0 %v676
    %693 = vmatprep.subr.mxu0 0.0
    %694 = vmatpush1.msra.mxu0 %v677
    %695 = vmatprep.subr.mxu0 0.0
    %696 = vmatpush1.msra.mxu0 %v678
    %697 = vmatprep.subr.mxu0 0.0
    %698 = vmatpush1.msra.mxu0 0.0
    %699 = vmatprep.subr.mxu0 0.0
    %700 = vmatpush1.msra.mxu0 0.0
    %701 = vmatprep.subr.mxu0 0.0
    %702 = vmatpush1.msra.mxu0 0.0
    %703 = vmatprep.subr.mxu0 0.0
    %704 = vmatpush1.msra.mxu0 0.0
    %705 = vmatprep.subr.mxu0 0.0
    %706 = vmatpush1.msra.mxu0 0.0
    %707 = vmatprep.subr.mxu0 0.0
    %708 = vmatpush1.msra.mxu0 0.0
    %709 = vmatprep.subr.mxu0 0.0
    %710 = vmatpush1.msra.mxu0 0.0
    %711 = vmatprep.subr.mxu0 0.0
    %712 = vmatpush1.msra.mxu0 0.0
    %713 = vmatprep.subr.mxu0 0.0
    %714 = vmatpush1.msra.mxu0 0.0
    %715 = vmatprep.subr.mxu0 0.0
    %716 = vmatpush1.msra.mxu0 0.0
    %717 = vmatprep.subr.mxu0 0.0
    %718 = vmatpush1.msra.mxu0 0.0
    %719 = vmatprep.subr.mxu0 0.0
    %720 = vmatpush1.msra.mxu0 0.0
    %721 = vmatprep.subr.mxu0 0.0
    %722 = vmatpush1.msra.mxu0 0.0
    %723 = vmatprep.subr.mxu0 0.0
    %724 = vmatpush1.msra.mxu0 0.0
    %725 = vmatprep.subr.mxu0 0.0
    %726 = vmatpush1.msra.mxu0 0.0
    %727 = vmatprep.subr.mxu0 0.0
    %728 = vmatpush1.msra.mxu0 0.0
    %729 = vmatprep.subr.mxu0 0.0
    %730 = vmatpush1.msra.mxu0 0.0
    %731 = vmatprep.subr.mxu0 0.0
    %732 = vmatpush1.msra.mxu0 0.0
    %733 = vmatprep.subr.mxu0 0.0
    %734 = vmatpush1.msra.mxu0 0.0
    %735 = vmatprep.subr.mxu0 0.0
    %736 = vmatpush1.msra.mxu0 0.0
    %737 = vmatprep.subr.mxu0 0.0
    %738 = vmatpush1.msra.mxu0 0.0
    %739 = vmatprep.subr.mxu0 0.0
    %740 = vmatpush1.msra.mxu0 0.0
    %741 = vmatprep.subr.mxu0 0.0
    %742 = vmatpush1.msra.mxu0 0.0
    %743 = vmatprep.subr.mxu0 0.0
    %744 = vmatpush1.msra.mxu0 0.0
    %745 = vmatprep.subr.mxu0 0.0
    %746 = vmatpush1.msra.mxu0 0.0
    %747 = vmatprep.subr.mxu0 0.0
    %748 = vmatpush1.msra.mxu0 0.0
    %749 = vmatprep.subr.mxu0 0.0
    %750 = vmatpush1.msra.mxu0 0.0
    %751 = vmatprep.subr.mxu0 0.0
    %752 = vmatpush1.msra.mxu0 0.0
    %753 = vmatprep.mubr.f32.mxu0 0.0
    %754 = vmatmul.mubr.f32.gmra.mrb[0].mxu0 %v687
    %v755 = vpop.f32.mrb[0].mxu0
    %v756 = vadd.f32 %v684, %v755
    %v757 = vpop.f32.mrb[0].mxu0
    %758 = vdwg.mxu0
    %vm759 = vcmask 9216
    %760 = vst.msk [vmem:[#allocation2] sm:$0x3] %vm759, %v756
    // Predicated region
    $region46: #{latent_discriminator_forward.1} parent=1 // pred_check
      _
    $region47: #{latent_discriminator_forward.1} parent=1 // pred_check_branch
      %762 = sbr.rel (0) target = $region49
    $region48: #{latent_discriminator_forward.1} parent=1 // pred_region
      %s764 = ssub.s32 32, 32
      %765 = vsyncadd [#allocation3], %s764
      %s767 = sshll.u32 [#allocation2], 4
      %s768 = int_to_ptr.vmem [resolvable:$true] %s767
      %770 = dma.vmem_to_hbm [thread:$0]  %s768, 32, %s11, [#allocation3]
    $region49: #{latent_discriminator_forward.1} parent=1 // pred_fallthru
      _
    // Predicated region
    $region50: #{latent_discriminator_forward.1} parent=1 // pred_check
      _
    $region51: #{latent_discriminator_forward.1} parent=1 // pred_check_branch
      %772 = sbr.rel (0) target = $region53
    $region52: #{latent_discriminator_forward.1} parent=1 // pred_region
      %773 = dma.done [#allocation3], 32
    $region53: #{latent_discriminator_forward.1} parent=1 // pred_fallthru
      _
    %774 = vsyncpa [#allocation3], 1

</llo_original>
